<compile_context>
chip_gen: v7x
topology: tpu7x:2x2x1
jax: 0.10.0
libtpu: 0.0.40
codegen_flags: <defaults>
</compile_context>

<pallas_src>
import functools

import jax
import jax.numpy as jnp
from jax import lax
from jax.experimental import pallas as pl
from jax.experimental.pallas import tpu as pltpu

NEG_SLOPE = 0.01   # torch.nn.LeakyReLU default
LN_EPS = 1e-5      # torch.nn.LayerNorm default


def _round_up(n, m):
    return ((n + m - 1) // m) * m


def _leaky_relu(x):
    return jnp.where(x >= 0, x, NEG_SLOPE * x)


def _layer_norm_leaky(h):
    """Centered two-pass LayerNorm (no affine) fused with LeakyReLU."""
    mean = jnp.mean(h, axis=-1, keepdims=True)
    c = h - mean
    var = jnp.mean(c * c, axis=-1, keepdims=True)
    return _leaky_relu(c * lax.rsqrt(var + LN_EPS))


def _make_kernel(n_input, tk, k_ragged):
    """Kernel factory closing over static K-tiling info."""

    def kernel(x_ref, w1_ref, b1_ref, w2_ref, b2_ref, w3_ref, b3_ref,
               o_ref, acc_ref):
        k = pl.program_id(1)

        @pl.when(k == 0)
        def _():
            acc_ref[...] = jnp.zeros_like(acc_ref)

        # Layer-1 partial matmul (x streamed f32, cast to bf16 here; f32 acc).
        xb = x_ref[...]
        if k_ragged:
            # zero the out-of-range K columns of the ragged last K block
            col = lax.broadcasted_iota(jnp.int32, xb.shape, 1) + k * tk
            xb = jnp.where(col < n_input, xb, 0.0)
        acc_ref[...] += jnp.dot(xb.astype(jnp.bfloat16), w1_ref[...],
                                preferred_element_type=jnp.float32)

        @pl.when(k == pl.num_programs(1) - 1)
        def _():
            # Layer 1: bias -> LayerNorm -> LeakyReLU
            h = _layer_norm_leaky(acc_ref[...] + b1_ref[...])
            # Layer 2: Linear -> LayerNorm -> LeakyReLU
            h = jnp.dot(h.astype(jnp.bfloat16), w2_ref[...],
                        preferred_element_type=jnp.float32) + b2_ref[...]
            h = _layer_norm_leaky(h)
            # Output head as a transposed MXU matmul -> lane-dense (1, TILE_B)
            y = lax.dot_general(w3_ref[...], h, (((1,), (1,)), ((), ())),
                                preferred_element_type=jnp.float32)
            y = y + b3_ref[...]
            o_ref[...] = _leaky_relu(y)[None].astype(o_ref.dtype)

    return kernel


def _vmem_capacity_bytes():
    try:
        return int(pltpu.get_tpu_info().vmem_capacity_bytes)
    except Exception:
        return 64 << 20   # conservative default (v7x per-TensorCore VMEM)


def _choose_tiles(B, K, H, vmem_cap):
    """Pick (TK, max TILE_B) so the working set fits a per-generation budget."""
    budget = min(vmem_cap // 2, 64 << 20)   # leave headroom for spills etc.

    def max_tile_b(tk, w1_bufs):
        fixed = (w1_bufs * tk * H * 2          # w1 chunk(s), bf16
                 + 2 * H * H * 2               # w2 (buffered), bf16
                 + 8 * H * 4 + (256 << 10))    # biases / w3 / slack
        per_row = (2 * tk * 4                  # double-buffered f32 x row
                   + 6 * H * 4                 # acc scratch + LN / matmul temps
                   + 2 * 4)                    # output row
        if budget <= fixed:
            return 0
        return ((budget - fixed) // per_row) // 8 * 8

    # Path A: full-K-resident w1 (single K step) if a decent batch tile fits.
    tb = max_tile_b(K, 2)
    if tb >= min(128, _round_up(B, 8)):
        return K, int(min(tb, 1024))

    # Path B: K-tiled reduction grid for large n_input (ATAC-scale K).
    tk = 4096
    while tk > 128 and max_tile_b(tk, 2) < 128:
        tk //= 2
    return tk, int(min(max(max_tile_b(tk, 2), 8), 1024))


def library_size_encoder(x, params):
    """x: [B, n_input] float32; params: dict of pre-transposed ([in, out]) weights."""
    x = x.astype(jnp.float32)
    B, K = x.shape
    H = params["w1"].shape[1]

    vmem_cap = _vmem_capacity_bytes()
    TK, tb_budget = _choose_tiles(B, K, H, vmem_cap)

    TILE_B = max(8, min(tb_budget, _round_up(B, 8)))
    # Give the second TensorCore (v7x megacore) work when the batch is big enough.
    if B >= 256 and _round_up(B, 8) <= TILE_B:
        TILE_B = _round_up((B + 1) // 2, 8)
    B_pad = _round_up(B, TILE_B)
    num_b_tiles = B_pad // TILE_B

    if TK == K:
        K_pad, k_tiles, k_ragged = K, 1, False
    else:
        K_pad = _round_up(K, TK)
        k_tiles = K_pad // TK
        k_ragged = (K_pad != K)

    # Weights in bf16 for the MXU (biases / head in f32).  x itself is streamed
    # as-is; w1 is zero-padded along K only in the K-tiled path (cheap: K x H).
    w1 = params["w1"].astype(jnp.bfloat16)
    if K_pad != K:
        w1 = jnp.zeros((K_pad, H), jnp.bfloat16).at[:K, :].set(w1)
    w2 = params["w2"].astype(jnp.bfloat16)
    b1 = params["b1"].astype(jnp.float32).reshape(1, H)
    b2 = params["b2"].astype(jnp.float32).reshape(1, H)
    w3 = params["w3"].astype(jnp.float32).reshape(1, H)
    b3 = params["b3"].astype(jnp.float32).reshape(1, 1)

    kernel = _make_kernel(K, TK, k_ragged)
    grid = (num_b_tiles, k_tiles)

    # Advisory cost estimate for the XLA scheduler.
    flops = 2 * B_pad * H * (K_pad + H) + 2 * B_pad * H
    bytes_accessed = (B * K * 4 + K_pad * H * 2 + H * H * 2
                      + (3 * H + 1) * 4 + B_pad * 4)
    cost = pl.CostEstimate(flops=int(flops), transcendentals=4 * B_pad,
                           bytes_accessed=int(bytes_accessed))

    # Raise the scoped-VMEM limit only if needed; clamp below physical VMEM.
    vmem_est = (2 * TILE_B * TK * 4          # double-buffered f32 x tile
                + 2 * TK * H * 2             # w1 buffers (bf16)
                + 2 * H * H * 2              # w2 buffers (bf16)
                + 5 * TILE_B * H * 4         # acc scratch + intermediates
                + 2 * TILE_B * 4             # output buffers
                + (1 << 20))                 # headroom
    cp_kwargs = dict(dimension_semantics=("parallel", "arbitrary"))
    if vmem_est > (32 << 20):
        cp_kwargs["vmem_limit_bytes"] = int(
            min(vmem_est + (2 << 20), vmem_cap - (4 << 20)))

    def run(single_buffer_weights):
        const_kw = (dict(pipeline_mode=pl.Buffered(1))
                    if single_buffer_weights else {})
        resident = lambda i, k: (0, 0)
        in_specs = [
            pl.BlockSpec((TILE_B, TK), lambda i, k: (i, k)),              # x (f32)
            pl.BlockSpec((TK, H), lambda i, k: (0, k),
                         **(const_kw if k_tiles == 1 else {})),           # w1
            pl.BlockSpec((1, H), resident, **const_kw),                   # b1
            pl.BlockSpec((H, H), resident, **const_kw),                   # w2
            pl.BlockSpec((1, H), resident, **const_kw),                   # b2
            pl.BlockSpec((1, H), resident, **const_kw),                   # w3
            pl.BlockSpec((1, 1), resident, **const_kw),                   # b3
        ]
        out_specs = pl.BlockSpec((1, 1, TILE_B), lambda i, k: (i, 0, 0))
        return pl.pallas_call(
            kernel,
            out_shape=jax.ShapeDtypeStruct((num_b_tiles, 1, TILE_B), jnp.float32),
            grid=grid,
            in_specs=in_specs,
            out_specs=out_specs,
            scratch_shapes=[pltpu.VMEM((TILE_B, H), jnp.float32)],
            compiler_params=pltpu.CompilerParams(**cp_kwargs),
            cost_estimate=cost,
        )(x, w1, b1, w2, b2, w3, b3)

    try:
        out = run(True)
    except Exception:
        # pipeline_mode=pl.Buffered(1) unsupported on this jax version -> default buffering
        out = run(False)

    return out.reshape(-1)[:B].reshape(B, 1)


def init_params(key, n_input, n_hidden):
    """Deterministic synthetic parameters (weights stored as [in, out])."""
    k1, k2, k3, k4, k5, k6 = jax.random.split(key, 6)
    s1 = 1.0 / jnp.sqrt(n_input)
    s2 = 1.0 / jnp.sqrt(n_hidden)
    return {
        "w1": jax.random.uniform(k1, (n_input, n_hidden), jnp.float32, -s1, s1),
        "b1": jax.random.uniform(k2, (1, n_hidden), jnp.float32, -s1, s1),
        "w2": jax.random.uniform(k3, (n_hidden, n_hidden), jnp.float32, -s2, s2),
        "b2": jax.random.uniform(k4, (1, n_hidden), jnp.float32, -s2, s2),
        "w3": jax.random.uniform(k5, (n_hidden, 1), jnp.float32, -s2, s2),
        "b3": jax.random.uniform(k6, (1, 1), jnp.float32, -s2, s2),
    }


def reference_forward(x, p):
    """Pure-JAX reference mirroring the PyTorch module (matmul inputs bf16-rounded
    to match the kernel's MXU precision; centered two-pass LayerNorm)."""
    def ln(h):
        mean = jnp.mean(h, axis=-1, keepdims=True)
        c = h - mean
        var = jnp.mean(c * c, axis=-1, keepdims=True)
        return c * lax.rsqrt(var + LN_EPS)

    bf = lambda a: a.astype(jnp.bfloat16).astype(jnp.float32)
    mm = functools.partial(jnp.matmul, precision=lax.Precision.HIGHEST)
    h = mm(bf(x), bf(p["w1"])) + p["b1"]
    h = _leaky_relu(ln(h))
    h = mm(bf(h), bf(p["w2"])) + p["b2"]
    h = _leaky_relu(ln(h))
    y = mm(h, p["w3"]) + p["b3"]
    return _leaky_relu(y)


if __name__ == "__main__":
    # TODO(synk): categorical covariate one-hot injection (n_cat_list) is not
    # implemented; the spec'd configuration (n_cat_list=None) has none.
    B, N_INPUT, N_HIDDEN = 8, 32, 128  # small demo shapes

    key = jax.random.PRNGKey(0)
    kx, kp = jax.random.split(key)
    x = jax.random.normal(kx, (B, N_INPUT), jnp.float32)
    params = init_params(kp, N_INPUT, N_HIDDEN)

    out = jax.block_until_ready(library_size_encoder(x, params))
    ref = reference_forward(x, params)

    assert out.shape == (B, 1)
    max_diff = float(jnp.max(jnp.abs(out - ref)))
    assert jnp.allclose(out, ref, atol=2e-3, rtol=2e-3), (
        f"mismatch vs reference, max abs diff = {max_diff}")

    print("KERNEL_OK")
</pallas_src>

<mosaic_0001>
module attributes {stable_mosaic.version = 11 : i64} {
  func.func @kernel(%arg0: i32, %arg1: i32, %arg2: memref<8x32xf32, #tpu.memory_space<vmem>>, %arg3: memref<32x128xbf16, #tpu.memory_space<vmem>>, %arg4: memref<1x128xf32, #tpu.memory_space<vmem>>, %arg5: memref<128x128xbf16, #tpu.memory_space<vmem>>, %arg6: memref<1x128xf32, #tpu.memory_space<vmem>>, %arg7: memref<1x128xf32, #tpu.memory_space<vmem>>, %arg8: memref<1x1xf32, #tpu.memory_space<vmem>>, %arg9: memref<1x1x8xf32, #tpu.memory_space<vmem>>, %arg10: memref<8x128xf32, #tpu.memory_space<vmem>>) attributes {dimension_semantics = [#tpu.dimension_semantics<parallel>, #tpu.dimension_semantics<arbitrary>], iteration_bounds = array<i64: 1, 1>, scalar_prefetch = 0 : i64, scratch_operands = 1 : i64, tpu.core_type = #tpu.core_type<tc>, window_params = [{transform_indices = @transform_0, window_bounds = array<i64: 8, 32>}, {pipeline_mode = #tpu.pipeline_mode<synchronous>, transform_indices = @transform_1, window_bounds = array<i64: 32, 128>}, {pipeline_mode = #tpu.pipeline_mode<synchronous>, transform_indices = @transform_2, window_bounds = array<i64: 1, 128>}, {pipeline_mode = #tpu.pipeline_mode<synchronous>, transform_indices = @transform_3, window_bounds = array<i64: 128, 128>}, {pipeline_mode = #tpu.pipeline_mode<synchronous>, transform_indices = @transform_4, window_bounds = array<i64: 1, 128>}, {pipeline_mode = #tpu.pipeline_mode<synchronous>, transform_indices = @transform_5, window_bounds = array<i64: 1, 128>}, {pipeline_mode = #tpu.pipeline_mode<synchronous>, transform_indices = @transform_6, window_bounds = array<i64: 1, 1>}, {transform_indices = @transform_7, window_bounds = array<i64: 1, 1, 8>}]} {
    %c0_i32 = arith.constant 0 : i32
    %0 = arith.cmpi eq, %arg1, %c0_i32 : i32
    %1 = arith.extui %0 : i1 to i32
    %c0_i32_0 = arith.constant 0 : i32
    %2 = arith.cmpi ne, %1, %c0_i32_0 : i32
    scf.if %2 {
      %cst_10 = arith.constant 0.000000e+00 : f32
      %13 = vector.broadcast %cst_10 : f32 to vector<8x128xf32>
      %c0_11 = arith.constant 0 : index
      %c0_12 = arith.constant 0 : index
      %14 = vector.load %arg10[%c0_11, %c0_12] : memref<8x128xf32, #tpu.memory_space<vmem>>, vector<8x128xf32>
      tpu.vector_store %arg10[%c0_11, %c0_12], %13 {strides = array<i32>} : memref<8x128xf32, #tpu.memory_space<vmem>>, vector<8x128xf32>,
    } else {
    }
    %c0 = arith.constant 0 : index
    %c0_1 = arith.constant 0 : index
    %3 = vector.load %arg2[%c0, %c0_1] : memref<8x32xf32, #tpu.memory_space<vmem>>, vector<8x32xf32>
    %c0_2 = arith.constant 0 : index
    %c0_3 = arith.constant 0 : index
    %4 = vector.load %arg10[%c0_2, %c0_3] : memref<8x128xf32, #tpu.memory_space<vmem>>, vector<8x128xf32>
    %5 = arith.truncf %3 : vector<8x32xf32> to vector<8x32xbf16>
    %c0_4 = arith.constant 0 : index
    %c0_5 = arith.constant 0 : index
    %6 = vector.load %arg3[%c0_4, %c0_5] : memref<32x128xbf16, #tpu.memory_space<vmem>>, vector<32x128xbf16>
    %cst = arith.constant dense<0.000000e+00> : vector<8x128xf32>
    %7 = tpu.matmul %5, %6, %cst {dimension_numbers = #tpu.dot_dimension_numbers<[1], [0], [0], [1], [0, 0, 1, 1], [], []>} : vector<8x32xbf16>, vector<32x128xbf16>, vector<8x128xf32> -> vector<8x128xf32>
    %8 = arith.addf %4, %7 : vector<8x128xf32>
    %c0_6 = arith.constant 0 : index
    %c0_7 = arith.constant 0 : index
    %9 = vector.load %arg10[%c0_6, %c0_7] : memref<8x128xf32, #tpu.memory_space<vmem>>, vector<8x128xf32>
    tpu.vector_store %arg10[%c0_6, %c0_7], %8 {strides = array<i32>} : memref<8x128xf32, #tpu.memory_space<vmem>>, vector<8x128xf32>,
    %c0_i32_8 = arith.constant 0 : i32
    %10 = arith.cmpi eq, %arg1, %c0_i32_8 : i32
    %11 = arith.extui %10 : i1 to i32
    %c0_i32_9 = arith.constant 0 : i32
    %12 = arith.cmpi ne, %11, %c0_i32_9 : i32
    scf.if %12 {
      %c0_10 = arith.constant 0 : index
      %c0_11 = arith.constant 0 : index
      %13 = vector.load %arg10[%c0_10, %c0_11] : memref<8x128xf32, #tpu.memory_space<vmem>>, vector<8x128xf32>
      %c0_12 = arith.constant 0 : index
      %c0_13 = arith.constant 0 : index
      %14 = vector.load %arg4[%c0_12, %c0_13] : memref<1x128xf32, #tpu.memory_space<vmem>>, vector<1x128xf32>
      %15 = vector.broadcast %14 : vector<1x128xf32> to vector<8x128xf32>
      %16 = arith.addf %13, %15 : vector<8x128xf32>
      %cst_14 = arith.constant dense<0.000000e+00> : vector<8xf32>
      %17 = vector.multi_reduction <add>, %16, %cst_14 [1] : vector<8x128xf32> to vector<8xf32>
      %18 = vector.shape_cast %17 : vector<8xf32> to vector<8x1xf32>
      %cst_15 = arith.constant 1.280000e+02 : f32
      %19 = vector.broadcast %cst_15 : f32 to vector<8x1xf32>
      %20 = arith.divf %18, %19 : vector<8x1xf32>
      %21 = vector.broadcast %20 : vector<8x1xf32> to vector<8x128xf32>
      %22 = arith.subf %16, %21 : vector<8x128xf32>
      %23 = arith.mulf %22, %22 : vector<8x128xf32>
      %cst_16 = arith.constant dense<0.000000e+00> : vector<8xf32>
      %24 = vector.multi_reduction <add>, %23, %cst_16 [1] : vector<8x128xf32> to vector<8xf32>
      %25 = vector.shape_cast %24 : vector<8xf32> to vector<8x1xf32>
      %cst_17 = arith.constant 1.280000e+02 : f32
      %26 = vector.broadcast %cst_17 : f32 to vector<8x1xf32>
      %27 = arith.divf %25, %26 : vector<8x1xf32>
      %cst_18 = arith.constant 9.99999974E-6 : f32
      %28 = vector.broadcast %cst_18 : f32 to vector<8x1xf32>
      %29 = arith.addf %27, %28 : vector<8x1xf32>
      %30 = math.rsqrt %29 : vector<8x1xf32>
      %31 = vector.broadcast %30 : vector<8x1xf32> to vector<8x128xf32>
      %32 = arith.mulf %22, %31 : vector<8x128xf32>
      %cst_19 = arith.constant 0.000000e+00 : f32
      %33 = vector.broadcast %cst_19 : f32 to vector<8x128xf32>
      %34 = arith.cmpf oge, %32, %33 : vector<8x128xf32>
      %cst_20 = arith.constant 0.00999999977 : f32
      %35 = vector.broadcast %cst_20 : f32 to vector<8x128xf32>
      %36 = arith.mulf %35, %32 : vector<8x128xf32>
      %37 = arith.select %34, %32, %36 : vector<8x128xi1>, vector<8x128xf32>
      %38 = arith.truncf %37 : vector<8x128xf32> to vector<8x128xbf16>
      %c0_21 = arith.constant 0 : index
      %c0_22 = arith.constant 0 : index
      %39 = vector.load %arg5[%c0_21, %c0_22] : memref<128x128xbf16, #tpu.memory_space<vmem>>, vector<128x128xbf16>
      %cst_23 = arith.constant dense<0.000000e+00> : vector<8x128xf32>
      %40 = tpu.matmul %38, %39, %cst_23 {dimension_numbers = #tpu.dot_dimension_numbers<[1], [0], [0], [1], [0, 0, 1, 1], [], []>} : vector<8x128xbf16>, vector<128x128xbf16>, vector<8x128xf32> -> vector<8x128xf32>
      %c0_24 = arith.constant 0 : index
      %c0_25 = arith.constant 0 : index
      %41 = vector.load %arg6[%c0_24, %c0_25] : memref<1x128xf32, #tpu.memory_space<vmem>>, vector<1x128xf32>
      %42 = vector.broadcast %41 : vector<1x128xf32> to vector<8x128xf32>
      %43 = arith.addf %40, %42 : vector<8x128xf32>
      %cst_26 = arith.constant dense<0.000000e+00> : vector<8xf32>
      %44 = vector.multi_reduction <add>, %43, %cst_26 [1] : vector<8x128xf32> to vector<8xf32>
      %45 = vector.shape_cast %44 : vector<8xf32> to vector<8x1xf32>
      %cst_27 = arith.constant 1.280000e+02 : f32
      %46 = vector.broadcast %cst_27 : f32 to vector<8x1xf32>
      %47 = arith.divf %45, %46 : vector<8x1xf32>
      %48 = vector.broadcast %47 : vector<8x1xf32> to vector<8x128xf32>
      %49 = arith.subf %43, %48 : vector<8x128xf32>
      %50 = arith.mulf %49, %49 : vector<8x128xf32>
      %cst_28 = arith.constant dense<0.000000e+00> : vector<8xf32>
      %51 = vector.multi_reduction <add>, %50, %cst_28 [1] : vector<8x128xf32> to vector<8xf32>
      %52 = vector.shape_cast %51 : vector<8xf32> to vector<8x1xf32>
      %cst_29 = arith.constant 1.280000e+02 : f32
      %53 = vector.broadcast %cst_29 : f32 to vector<8x1xf32>
      %54 = arith.divf %52, %53 : vector<8x1xf32>
      %cst_30 = arith.constant 9.99999974E-6 : f32
      %55 = vector.broadcast %cst_30 : f32 to vector<8x1xf32>
      %56 = arith.addf %54, %55 : vector<8x1xf32>
      %57 = math.rsqrt %56 : vector<8x1xf32>
      %58 = vector.broadcast %57 : vector<8x1xf32> to vector<8x128xf32>
      %59 = arith.mulf %49, %58 : vector<8x128xf32>
      %cst_31 = arith.constant 0.000000e+00 : f32
      %60 = vector.broadcast %cst_31 : f32 to vector<8x128xf32>
      %61 = arith.cmpf oge, %59, %60 : vector<8x128xf32>
      %cst_32 = arith.constant 0.00999999977 : f32
      %62 = vector.broadcast %cst_32 : f32 to vector<8x128xf32>
      %63 = arith.mulf %62, %59 : vector<8x128xf32>
      %64 = arith.select %61, %59, %63 : vector<8x128xi1>, vector<8x128xf32>
      %c0_33 = arith.constant 0 : index
      %c0_34 = arith.constant 0 : index
      %65 = vector.load %arg7[%c0_33, %c0_34] : memref<1x128xf32, #tpu.memory_space<vmem>>, vector<1x128xf32>
      %cst_35 = arith.constant dense<0.000000e+00> : vector<1x8xf32>
      %66 = tpu.matmul %65, %64, %cst_35 {dimension_numbers = #tpu.dot_dimension_numbers<[1], [1], [0], [0], [0, 0, 1, 0], [], []>} : vector<1x128xf32>, vector<8x128xf32>, vector<1x8xf32> -> vector<1x8xf32>
      %c0_36 = arith.constant 0 : index
      %c0_37 = arith.constant 0 : index
      %67 = vector.load %arg8[%c0_36, %c0_37] : memref<1x1xf32, #tpu.memory_space<vmem>>, vector<1x1xf32>
      %68 = vector.broadcast %67 : vector<1x1xf32> to vector<1x8xf32>
      %69 = arith.addf %66, %68 : vector<1x8xf32>
      %cst_38 = arith.constant 0.000000e+00 : f32
      %70 = vector.broadcast %cst_38 : f32 to vector<1x8xf32>
      %71 = arith.cmpf oge, %69, %70 : vector<1x8xf32>
      %cst_39 = arith.constant 0.00999999977 : f32
      %72 = vector.broadcast %cst_39 : f32 to vector<1x8xf32>
      %73 = arith.mulf %72, %69 : vector<1x8xf32>
      %74 = arith.select %71, %69, %73 : vector<1x8xi1>, vector<1x8xf32>
      %75 = vector.shape_cast %74 : vector<1x8xf32> to vector<1x1x8xf32>
      %c0_40 = arith.constant 0 : index
      %c0_41 = arith.constant 0 : index
      %c0_42 = arith.constant 0 : index
      %76 = vector.load %arg9[%c0_40, %c0_41, %c0_42] : memref<1x1x8xf32, #tpu.memory_space<vmem>>, vector<1x1x8xf32>
      tpu.vector_store %arg9[%c0_40, %c0_41, %c0_42], %75 {strides = array<i32>} : memref<1x1x8xf32, #tpu.memory_space<vmem>>, vector<1x1x8xf32>,
    } else {
    }
    return
  }
  func.func @transform_0(%arg0: i32, %arg1: i32) -> (i32, i32) {
    %c0_i32 = arith.constant 0 : i32
    return %arg0, %arg1 : i32, i32
  }
  func.func @transform_1(%arg0: i32, %arg1: i32) -> (i32, i32) {
    %c0_i32 = arith.constant 0 : i32
    %c0_i32_0 = arith.constant 0 : i32
    return %c0_i32, %arg1 : i32, i32
  }
  func.func @transform_2(%arg0: i32, %arg1: i32) -> (i32, i32) {
    %c0_i32 = arith.constant 0 : i32
    %c0_i32_0 = arith.constant 0 : i32
    %c0_i32_1 = arith.constant 0 : i32
    return %c0_i32, %c0_i32_0 : i32, i32
  }
  func.func @transform_3(%arg0: i32, %arg1: i32) -> (i32, i32) {
    %c0_i32 = arith.constant 0 : i32
    %c0_i32_0 = arith.constant 0 : i32
    %c0_i32_1 = arith.constant 0 : i32
    return %c0_i32, %c0_i32_0 : i32, i32
  }
  func.func @transform_4(%arg0: i32, %arg1: i32) -> (i32, i32) {
    %c0_i32 = arith.constant 0 : i32
    %c0_i32_0 = arith.constant 0 : i32
    %c0_i32_1 = arith.constant 0 : i32
    return %c0_i32, %c0_i32_0 : i32, i32
  }
  func.func @transform_5(%arg0: i32, %arg1: i32) -> (i32, i32) {
    %c0_i32 = arith.constant 0 : i32
    %c0_i32_0 = arith.constant 0 : i32
    %c0_i32_1 = arith.constant 0 : i32
    return %c0_i32, %c0_i32_0 : i32, i32
  }
  func.func @transform_6(%arg0: i32, %arg1: i32) -> (i32, i32) {
    %c0_i32 = arith.constant 0 : i32
    %c0_i32_0 = arith.constant 0 : i32
    %c0_i32_1 = arith.constant 0 : i32
    return %c0_i32, %c0_i32_0 : i32, i32
  }
  func.func @transform_7(%arg0: i32, %arg1: i32) -> (i32, i32, i32) {
    %c0_i32 = arith.constant 0 : i32
    %c0_i32_0 = arith.constant 0 : i32
    %c0_i32_1 = arith.constant 0 : i32
    return %arg0, %c0_i32, %c0_i32_0 : i32, i32, i32
  }
}

module attributes {stable_mosaic.version = 11 : i64} {
  func.func @kernel(%arg0: i32, %arg1: i32, %arg2: memref<8x32xf32, #tpu.memory_space<vmem>>, %arg3: memref<32x128xbf16, #tpu.memory_space<vmem>>, %arg4: memref<1x128xf32, #tpu.memory_space<vmem>>, %arg5: memref<128x128xbf16, #tpu.memory_space<vmem>>, %arg6: memref<1x128xf32, #tpu.memory_space<vmem>>, %arg7: memref<1x128xf32, #tpu.memory_space<vmem>>, %arg8: memref<1x1xf32, #tpu.memory_space<vmem>>, %arg9: memref<1x1x8xf32, #tpu.memory_space<vmem>>, %arg10: memref<8x128xf32, #tpu.memory_space<vmem>>) attributes {dimension_semantics = [#tpu.dimension_semantics<parallel>, #tpu.dimension_semantics<arbitrary>], iteration_bounds = array<i64: 1, 1>, scalar_prefetch = 0 : i64, scratch_operands = 1 : i64, tpu.core_type = #tpu.core_type<tc>, window_params = [{transform_indices = @transform_0, window_bounds = array<i64: 8, 32>}, {transform_indices = @transform_1, window_bounds = array<i64: 32, 128>}, {pipeline_mode = #tpu.pipeline_mode<synchronous>, transform_indices = @transform_2, window_bounds = array<i64: 1, 128>}, {pipeline_mode = #tpu.pipeline_mode<synchronous>, transform_indices = @transform_3, window_bounds = array<i64: 128, 128>}, {pipeline_mode = #tpu.pipeline_mode<synchronous>, transform_indices = @transform_4, window_bounds = array<i64: 1, 128>}, {pipeline_mode = #tpu.pipeline_mode<synchronous>, transform_indices = @transform_5, window_bounds = array<i64: 1, 128>}, {pipeline_mode = #tpu.pipeline_mode<synchronous>, transform_indices = @transform_6, window_bounds = array<i64: 1, 1>}, {transform_indices = @transform_7, window_bounds = array<i64: 1, 1, 8>}]} {
    %c0_i32 = arith.constant 0 : i32
    %0 = arith.cmpi eq, %arg1, %c0_i32 : i32
    %1 = arith.extui %0 : i1 to i32
    %c0_i32_0 = arith.constant 0 : i32
    %2 = arith.cmpi ne, %1, %c0_i32_0 : i32
    scf.if %2 {
      %cst_10 = arith.constant 0.000000e+00 : f32
      %13 = vector.broadcast %cst_10 : f32 to vector<8x128xf32>
      %c0_11 = arith.constant 0 : index
      %c0_12 = arith.constant 0 : index
      %14 = vector.load %arg10[%c0_11, %c0_12] : memref<8x128xf32, #tpu.memory_space<vmem>>, vector<8x128xf32>
      tpu.vector_store %arg10[%c0_11, %c0_12], %13 {strides = array<i32>} : memref<8x128xf32, #tpu.memory_space<vmem>>, vector<8x128xf32>,
    } else {
    }
    %c0 = arith.constant 0 : index
    %c0_1 = arith.constant 0 : index
    %3 = vector.load %arg2[%c0, %c0_1] : memref<8x32xf32, #tpu.memory_space<vmem>>, vector<8x32xf32>
    %c0_2 = arith.constant 0 : index
    %c0_3 = arith.constant 0 : index
    %4 = vector.load %arg10[%c0_2, %c0_3] : memref<8x128xf32, #tpu.memory_space<vmem>>, vector<8x128xf32>
    %5 = arith.truncf %3 : vector<8x32xf32> to vector<8x32xbf16>
    %c0_4 = arith.constant 0 : index
    %c0_5 = arith.constant 0 : index
    %6 = vector.load %arg3[%c0_4, %c0_5] : memref<32x128xbf16, #tpu.memory_space<vmem>>, vector<32x128xbf16>
    %cst = arith.constant dense<0.000000e+00> : vector<8x128xf32>
    %7 = tpu.matmul %5, %6, %cst {dimension_numbers = #tpu.dot_dimension_numbers<[1], [0], [0], [1], [0, 0, 1, 1], [], []>} : vector<8x32xbf16>, vector<32x128xbf16>, vector<8x128xf32> -> vector<8x128xf32>
    %8 = arith.addf %4, %7 : vector<8x128xf32>
    %c0_6 = arith.constant 0 : index
    %c0_7 = arith.constant 0 : index
    %9 = vector.load %arg10[%c0_6, %c0_7] : memref<8x128xf32, #tpu.memory_space<vmem>>, vector<8x128xf32>
    tpu.vector_store %arg10[%c0_6, %c0_7], %8 {strides = array<i32>} : memref<8x128xf32, #tpu.memory_space<vmem>>, vector<8x128xf32>,
    %c0_i32_8 = arith.constant 0 : i32
    %10 = arith.cmpi eq, %arg1, %c0_i32_8 : i32
    %11 = arith.extui %10 : i1 to i32
    %c0_i32_9 = arith.constant 0 : i32
    %12 = arith.cmpi ne, %11, %c0_i32_9 : i32
    scf.if %12 {
      %c0_10 = arith.constant 0 : index
      %c0_11 = arith.constant 0 : index
      %13 = vector.load %arg10[%c0_10, %c0_11] : memref<8x128xf32, #tpu.memory_space<vmem>>, vector<8x128xf32>
      %c0_12 = arith.constant 0 : index
      %c0_13 = arith.constant 0 : index
      %14 = vector.load %arg4[%c0_12, %c0_13] : memref<1x128xf32, #tpu.memory_space<vmem>>, vector<1x128xf32>
      %15 = vector.broadcast %14 : vector<1x128xf32> to vector<8x128xf32>
      %16 = arith.addf %13, %15 : vector<8x128xf32>
      %cst_14 = arith.constant dense<0.000000e+00> : vector<8xf32>
      %17 = vector.multi_reduction <add>, %16, %cst_14 [1] : vector<8x128xf32> to vector<8xf32>
      %18 = vector.shape_cast %17 : vector<8xf32> to vector<8x1xf32>
      %cst_15 = arith.constant 1.280000e+02 : f32
      %19 = vector.broadcast %cst_15 : f32 to vector<8x1xf32>
      %20 = arith.divf %18, %19 : vector<8x1xf32>
      %21 = vector.broadcast %20 : vector<8x1xf32> to vector<8x128xf32>
      %22 = arith.subf %16, %21 : vector<8x128xf32>
      %23 = arith.mulf %22, %22 : vector<8x128xf32>
      %cst_16 = arith.constant dense<0.000000e+00> : vector<8xf32>
      %24 = vector.multi_reduction <add>, %23, %cst_16 [1] : vector<8x128xf32> to vector<8xf32>
      %25 = vector.shape_cast %24 : vector<8xf32> to vector<8x1xf32>
      %cst_17 = arith.constant 1.280000e+02 : f32
      %26 = vector.broadcast %cst_17 : f32 to vector<8x1xf32>
      %27 = arith.divf %25, %26 : vector<8x1xf32>
      %cst_18 = arith.constant 9.99999974E-6 : f32
      %28 = vector.broadcast %cst_18 : f32 to vector<8x1xf32>
      %29 = arith.addf %27, %28 : vector<8x1xf32>
      %30 = math.rsqrt %29 : vector<8x1xf32>
      %31 = vector.broadcast %30 : vector<8x1xf32> to vector<8x128xf32>
      %32 = arith.mulf %22, %31 : vector<8x128xf32>
      %cst_19 = arith.constant 0.000000e+00 : f32
      %33 = vector.broadcast %cst_19 : f32 to vector<8x128xf32>
      %34 = arith.cmpf oge, %32, %33 : vector<8x128xf32>
      %cst_20 = arith.constant 0.00999999977 : f32
      %35 = vector.broadcast %cst_20 : f32 to vector<8x128xf32>
      %36 = arith.mulf %35, %32 : vector<8x128xf32>
      %37 = arith.select %34, %32, %36 : vector<8x128xi1>, vector<8x128xf32>
      %38 = arith.truncf %37 : vector<8x128xf32> to vector<8x128xbf16>
      %c0_21 = arith.constant 0 : index
      %c0_22 = arith.constant 0 : index
      %39 = vector.load %arg5[%c0_21, %c0_22] : memref<128x128xbf16, #tpu.memory_space<vmem>>, vector<128x128xbf16>
      %cst_23 = arith.constant dense<0.000000e+00> : vector<8x128xf32>
      %40 = tpu.matmul %38, %39, %cst_23 {dimension_numbers = #tpu.dot_dimension_numbers<[1], [0], [0], [1], [0, 0, 1, 1], [], []>} : vector<8x128xbf16>, vector<128x128xbf16>, vector<8x128xf32> -> vector<8x128xf32>
      %c0_24 = arith.constant 0 : index
      %c0_25 = arith.constant 0 : index
      %41 = vector.load %arg6[%c0_24, %c0_25] : memref<1x128xf32, #tpu.memory_space<vmem>>, vector<1x128xf32>
      %42 = vector.broadcast %41 : vector<1x128xf32> to vector<8x128xf32>
      %43 = arith.addf %40, %42 : vector<8x128xf32>
      %cst_26 = arith.constant dense<0.000000e+00> : vector<8xf32>
      %44 = vector.multi_reduction <add>, %43, %cst_26 [1] : vector<8x128xf32> to vector<8xf32>
      %45 = vector.shape_cast %44 : vector<8xf32> to vector<8x1xf32>
      %cst_27 = arith.constant 1.280000e+02 : f32
      %46 = vector.broadcast %cst_27 : f32 to vector<8x1xf32>
      %47 = arith.divf %45, %46 : vector<8x1xf32>
      %48 = vector.broadcast %47 : vector<8x1xf32> to vector<8x128xf32>
      %49 = arith.subf %43, %48 : vector<8x128xf32>
      %50 = arith.mulf %49, %49 : vector<8x128xf32>
      %cst_28 = arith.constant dense<0.000000e+00> : vector<8xf32>
      %51 = vector.multi_reduction <add>, %50, %cst_28 [1] : vector<8x128xf32> to vector<8xf32>
      %52 = vector.shape_cast %51 : vector<8xf32> to vector<8x1xf32>
      %cst_29 = arith.constant 1.280000e+02 : f32
      %53 = vector.broadcast %cst_29 : f32 to vector<8x1xf32>
      %54 = arith.divf %52, %53 : vector<8x1xf32>
      %cst_30 = arith.constant 9.99999974E-6 : f32
      %55 = vector.broadcast %cst_30 : f32 to vector<8x1xf32>
      %56 = arith.addf %54, %55 : vector<8x1xf32>
      %57 = math.rsqrt %56 : vector<8x1xf32>
      %58 = vector.broadcast %57 : vector<8x1xf32> to vector<8x128xf32>
      %59 = arith.mulf %49, %58 : vector<8x128xf32>
      %cst_31 = arith.constant 0.000000e+00 : f32
      %60 = vector.broadcast %cst_31 : f32 to vector<8x128xf32>
      %61 = arith.cmpf oge, %59, %60 : vector<8x128xf32>
      %cst_32 = arith.constant 0.00999999977 : f32
      %62 = vector.broadcast %cst_32 : f32 to vector<8x128xf32>
      %63 = arith.mulf %62, %59 : vector<8x128xf32>
      %64 = arith.select %61, %59, %63 : vector<8x128xi1>, vector<8x128xf32>
      %c0_33 = arith.constant 0 : index
      %c0_34 = arith.constant 0 : index
      %65 = vector.load %arg7[%c0_33, %c0_34] : memref<1x128xf32, #tpu.memory_space<vmem>>, vector<1x128xf32>
      %cst_35 = arith.constant dense<0.000000e+00> : vector<1x8xf32>
      %66 = tpu.matmul %65, %64, %cst_35 {dimension_numbers = #tpu.dot_dimension_numbers<[1], [1], [0], [0], [0, 0, 1, 0], [], []>} : vector<1x128xf32>, vector<8x128xf32>, vector<1x8xf32> -> vector<1x8xf32>
      %c0_36 = arith.constant 0 : index
      %c0_37 = arith.constant 0 : index
      %67 = vector.load %arg8[%c0_36, %c0_37] : memref<1x1xf32, #tpu.memory_space<vmem>>, vector<1x1xf32>
      %68 = vector.broadcast %67 : vector<1x1xf32> to vector<1x8xf32>
      %69 = arith.addf %66, %68 : vector<1x8xf32>
      %cst_38 = arith.constant 0.000000e+00 : f32
      %70 = vector.broadcast %cst_38 : f32 to vector<1x8xf32>
      %71 = arith.cmpf oge, %69, %70 : vector<1x8xf32>
      %cst_39 = arith.constant 0.00999999977 : f32
      %72 = vector.broadcast %cst_39 : f32 to vector<1x8xf32>
      %73 = arith.mulf %72, %69 : vector<1x8xf32>
      %74 = arith.select %71, %69, %73 : vector<1x8xi1>, vector<1x8xf32>
      %75 = vector.shape_cast %74 : vector<1x8xf32> to vector<1x1x8xf32>
      %c0_40 = arith.constant 0 : index
      %c0_41 = arith.constant 0 : index
      %c0_42 = arith.constant 0 : index
      %76 = vector.load %arg9[%c0_40, %c0_41, %c0_42] : memref<1x1x8xf32, #tpu.memory_space<vmem>>, vector<1x1x8xf32>
      tpu.vector_store %arg9[%c0_40, %c0_41, %c0_42], %75 {strides = array<i32>} : memref<1x1x8xf32, #tpu.memory_space<vmem>>, vector<1x1x8xf32>,
    } else {
    }
    return
  }
  func.func @transform_0(%arg0: i32, %arg1: i32) -> (i32, i32) {
    %c0_i32 = arith.constant 0 : i32
    return %arg0, %arg1 : i32, i32
  }
  func.func @transform_1(%arg0: i32, %arg1: i32) -> (i32, i32) {
    %c0_i32 = arith.constant 0 : i32
    %c0_i32_0 = arith.constant 0 : i32
    return %c0_i32, %arg1 : i32, i32
  }
  func.func @transform_2(%arg0: i32, %arg1: i32) -> (i32, i32) {
    %c0_i32 = arith.constant 0 : i32
    %c0_i32_0 = arith.constant 0 : i32
    %c0_i32_1 = arith.constant 0 : i32
    return %c0_i32, %c0_i32_0 : i32, i32
  }
  func.func @transform_3(%arg0: i32, %arg1: i32) -> (i32, i32) {
    %c0_i32 = arith.constant 0 : i32
    %c0_i32_0 = arith.constant 0 : i32
    %c0_i32_1 = arith.constant 0 : i32
    return %c0_i32, %c0_i32_0 : i32, i32
  }
  func.func @transform_4(%arg0: i32, %arg1: i32) -> (i32, i32) {
    %c0_i32 = arith.constant 0 : i32
    %c0_i32_0 = arith.constant 0 : i32
    %c0_i32_1 = arith.constant 0 : i32
    return %c0_i32, %c0_i32_0 : i32, i32
  }
  func.func @transform_5(%arg0: i32, %arg1: i32) -> (i32, i32) {
    %c0_i32 = arith.constant 0 : i32
    %c0_i32_0 = arith.constant 0 : i32
    %c0_i32_1 = arith.constant 0 : i32
    return %c0_i32, %c0_i32_0 : i32, i32
  }
  func.func @transform_6(%arg0: i32, %arg1: i32) -> (i32, i32) {
    %c0_i32 = arith.constant 0 : i32
    %c0_i32_0 = arith.constant 0 : i32
    %c0_i32_1 = arith.constant 0 : i32
    return %c0_i32, %c0_i32_0 : i32, i32
  }
  func.func @transform_7(%arg0: i32, %arg1: i32) -> (i32, i32, i32) {
    %c0_i32 = arith.constant 0 : i32
    %c0_i32_0 = arith.constant 0 : i32
    %c0_i32_1 = arith.constant 0 : i32
    return %arg0, %c0_i32, %c0_i32_0 : i32, i32, i32
  }
}

</mosaic_0001>

<llo_original>
// kernel: tpu_custom_call.1
$region0: #{tpu_custom_call.1}
  #allocation0 [shape = 'u32[]', space=smem, size = 0x4, offset = 0x4, fixed_abs, tag = 'smem constant byte address 0x4 - core index']
  #allocation1 [shape = 'u32[144,128]{1,0:T(1,128)}', space=vmem, size = 0x12000, scoped, tag = 'internal scratch']
  #allocation2 [shape = 'f32[8,128]{1,0:T(8,128)}', space=vmem, size = 0x1000, scoped, tag = 'scratch operand']
  #allocation3 [shape = 'f32[1,1]{1,0:T(1,128)S(1)}', space=vmem, size = 0x200, scoped, tag = 'scoped memory for tpu_custom_call.1']
  %s0 = inlined_call_operand.hbm [shape: f32[8,32], index: 0, kind: input, shape index: {}]
  %s1 = inlined_call_operand.hbm [shape: bf16[32,128], index: 1, kind: input, shape index: {}]
  %s2 = inlined_call_operand.vmem [shape: f32[1,128], index: 2, kind: input, shape index: {}]
  %s3 = inlined_call_operand.hbm [shape: bf16[128,128], index: 3, kind: input, shape index: {}]
  %s4 = inlined_call_operand.vmem [shape: f32[1,128], index: 4, kind: input, shape index: {}]
  %s5 = inlined_call_operand.vmem [shape: f32[1,128], index: 5, kind: input, shape index: {}]
  %s6 = inlined_call_operand.<no memory space> [shape: f32[1,1], index: 6, kind: input, shape index: {}]
  %s7 = inlined_call_operand.hbm [shape: f32[1,1,8], index: 7, kind: output, shape index: {}]
  %s8 = sld [smem:[#allocation0]]
  $region58: #{tpu_custom_call.1} parent=0
    _
  %s10 = ssub.s32 1, %s8
  %s11 = scalar_select 0, %s10, %s8
  %v12 = vstv %s6
  %13 = vst [vmem:[#allocation3] sm:$0x1] %v12
  $region1: #{tpu_custom_call.1} parent=0
    #allocation4 [shape = 'u8[4096]{0}', space=vmem, size = 0x1000, scoped, tag = 'input window, operand 0, single buffered']
    #allocation5 [shape = 's32[1]{0}', space=sflag, size = 0x4, scoped, tag = 'scoped memory for tpu_custom_call.1']
    #allocation6 [shape = 's32[1]{0}', space=sflag, size = 0x4, scoped, tag = 'scoped memory for tpu_custom_call.1']
    #allocation7 [shape = 'u8[8192]{0}', space=vmem, size = 0x2000, scoped, tag = 'input window, operand 1, single buffered']
    #allocation8 [shape = 's32[1]{0}', space=sflag, size = 0x4, scoped, tag = 'scoped memory for tpu_custom_call.1']
    #allocation9 [shape = 'u8[32768]{0}', space=vmem, size = 0x8000, scoped, tag = 'input window, operand 3, single buffered']
    #allocation10 [shape = 'u8[512]{0}', space=vmem, size = 0x400, scoped, tag = 'output window, operand 0, single buffered']
    %14 = vsyncpa [#allocation5], 0
    %15 = vsyncpa [#allocation8], 0
    %16 = vsyncpa [#allocation6], 0
    // Predicated region
    $region2: #{tpu_custom_call.1} parent=1 // pred_check
      _
    $region3: #{tpu_custom_call.1} parent=1 // pred_check_branch
      %18 = sbr.rel (0) target = $region5
    $region4: #{tpu_custom_call.1} parent=1 // pred_region
      %s20 = ssub.s32 128, 128
      %21 = vsyncadd [#allocation5], %s20
      %s23 = sshll.u32 [#allocation4], 4
      %s24 = int_to_ptr.vmem [resolvable:$true] %s23
      %26 = dma.hbm_to_vmem [thread:$0]  %s0, 128, %s24, [#allocation5]
    $region5: #{tpu_custom_call.1} parent=1 // pred_fallthru
      _
    // Predicated region
    $region6: #{tpu_custom_call.1} parent=1 // pred_check
      _
    $region7: #{tpu_custom_call.1} parent=1 // pred_check_branch
      %28 = sbr.rel (0) target = $region9
    $region8: #{tpu_custom_call.1} parent=1 // pred_region
      %s30 = ssub.s32 256, 256
      %31 = vsyncadd [#allocation8], %s30
      %s32 = sshll.u32 [#allocation7], 4
      %s33 = int_to_ptr.vmem [resolvable:$true] %s32
      %38 = dma.hbm_to_vmem [thread:$0]  %s1, 256, %s33, [#allocation8], 64, 64, 4
    $region9: #{tpu_custom_call.1} parent=1 // pred_fallthru
      _
    // Predicated region
    $region10: #{tpu_custom_call.1} parent=1 // pred_check
      _
    $region11: #{tpu_custom_call.1} parent=1 // pred_check_branch
      %40 = sbr.rel (0) target = $region13
    $region12: #{tpu_custom_call.1} parent=1 // pred_region
      _
    $region13: #{tpu_custom_call.1} parent=1 // pred_fallthru
      _
    // Predicated region
    $region14: #{tpu_custom_call.1} parent=1 // pred_check
      _
    $region15: #{tpu_custom_call.1} parent=1 // pred_check_branch
      %42 = sbr.rel (0) target = $region17
    $region16: #{tpu_custom_call.1} parent=1 // pred_region
      %s44 = ssub.s32 1024, 1024
      %45 = vsyncadd [#allocation8], %s44
      %s46 = sshll.u32 [#allocation9], 4
      %s47 = int_to_ptr.vmem [resolvable:$true] %s46
      %52 = dma.hbm_to_vmem [thread:$0]  %s3, 1024, %s47, [#allocation8], 64, 64, 4
    $region17: #{tpu_custom_call.1} parent=1 // pred_fallthru
      _
    // Predicated region
    $region18: #{tpu_custom_call.1} parent=1 // pred_check
      _
    $region19: #{tpu_custom_call.1} parent=1 // pred_check_branch
      %54 = sbr.rel (0) target = $region21
    $region20: #{tpu_custom_call.1} parent=1 // pred_region
      _
    $region21: #{tpu_custom_call.1} parent=1 // pred_fallthru
      _
    // Predicated region
    $region22: #{tpu_custom_call.1} parent=1 // pred_check
      _
    $region23: #{tpu_custom_call.1} parent=1 // pred_check_branch
      %56 = sbr.rel (0) target = $region25
    $region24: #{tpu_custom_call.1} parent=1 // pred_region
      _
    $region25: #{tpu_custom_call.1} parent=1 // pred_fallthru
      _
    // Predicated region
    $region26: #{tpu_custom_call.1} parent=1 // pred_check
      _
    $region27: #{tpu_custom_call.1} parent=1 // pred_check_branch
      %58 = sbr.rel (0) target = $region29
    $region28: #{tpu_custom_call.1} parent=1 // pred_region
      _
    $region29: #{tpu_custom_call.1} parent=1 // pred_fallthru
      _
    // Predicated region
    $region30: #{tpu_custom_call.1} parent=1 // pred_check
      _
    $region31: #{tpu_custom_call.1} parent=1 // pred_check_branch
      %60 = sbr.rel (0) target = $region33
    $region32: #{tpu_custom_call.1} parent=1 // pred_region
      %61 = dma.done [#allocation5], 128
    $region33: #{tpu_custom_call.1} parent=1 // pred_fallthru
      _
    // Predicated region
    $region34: #{tpu_custom_call.1} parent=1 // pred_check
      _
    $region35: #{tpu_custom_call.1} parent=1 // pred_check_branch
      %63 = sbr.rel (0) target = $region37
    $region36: #{tpu_custom_call.1} parent=1 // pred_region
      %64 = dma.done [#allocation8], 256
    $region37: #{tpu_custom_call.1} parent=1 // pred_fallthru
      _
    // Predicated region
    $region38: #{tpu_custom_call.1} parent=1 // pred_check
      _
    $region39: #{tpu_custom_call.1} parent=1 // pred_check_branch
      %66 = sbr.rel (0) target = $region41
    $region40: #{tpu_custom_call.1} parent=1 // pred_region
      %67 = dma.done [#allocation8], 1024
    $region41: #{tpu_custom_call.1} parent=1 // pred_fallthru
      _
    %p69 = scmp.eq.s32.totalorder 0, 0
    // Predicated region
    $region42: #{tpu_custom_call.1} parent=1 // pred_check
      %p70 = pneg %p69
    $region43: #{tpu_custom_call.1} parent=1 // pred_check_branch
      %72 = sbr.rel (%p70) target = $region45
    $region44: #{tpu_custom_call.1} parent=1 // pred_region
      %73 = vst [vmem:[#allocation2] sm:$0xff] 0.0
    $region45: #{tpu_custom_call.1} parent=1 // pred_fallthru
      _
    %v74 = vld [vmem:[#allocation4] sm:$0xff]
    %v75 = vld [vmem:[#allocation2] sm:$0xff]
    %v76 = vpack.c.bf16 %v74, %v74
    %v77 = vld [vmem:[#allocation7] sm:$0xf]
    %v78 = vld [vmem:[#allocation7 + $0x4] sm:$0xf]
    %v79 = vld [vmem:[#allocation7 + $0x8] sm:$0xf]
    %v80 = vld [vmem:[#allocation7 + $0xc] sm:$0xf]
    %v85 = vunpack.c.l.b16 %v77
    %v86 = vunpack.c.l.b16 %v78
    %v87 = vunpack.c.l.b16 %v79
    %v88 = vunpack.c.l.b16 %v80
    %v89 = vpack.c.b16 %v86, %v85
    %v90 = vpack.c.b16 %v88, %v87
    %vm93 = vcmask 261120
    %v95 = vsel %vm93, %v76, 0
    %97 = vmatprep.subr.bf16.mxu0 0
    %98 = vmatpush1.bf16.msra.mxu0 %v89
    %99 = vmatprep.subr.bf16.mxu0 0
    %100 = vmatpush1.bf16.msra.mxu0 %v90
    %101 = vmatprep.subr.bf16.mxu0 0
    %102 = vmatpush1.bf16.msra.mxu0 0
    %103 = vmatprep.subr.bf16.mxu0 0
    %104 = vmatpush1.bf16.msra.mxu0 0
    %105 = vmatprep.subr.bf16.mxu0 0
    %106 = vmatpush1.bf16.msra.mxu0 0
    %107 = vmatprep.subr.bf16.mxu0 0
    %108 = vmatpush1.bf16.msra.mxu0 0
    %109 = vmatprep.subr.bf16.mxu0 0
    %110 = vmatpush1.bf16.msra.mxu0 0
    %111 = vmatprep.subr.bf16.mxu0 0
    %112 = vmatpush1.bf16.msra.mxu0 0
    %113 = vmatprep.subr.bf16.mxu0 0
    %114 = vmatpush1.bf16.msra.mxu0 0
    %115 = vmatprep.subr.bf16.mxu0 0
    %116 = vmatpush1.bf16.msra.mxu0 0
    %117 = vmatprep.subr.bf16.mxu0 0
    %118 = vmatpush1.bf16.msra.mxu0 0
    %119 = vmatprep.subr.bf16.mxu0 0
    %120 = vmatpush1.bf16.msra.mxu0 0
    %121 = vmatprep.subr.bf16.mxu0 0
    %122 = vmatpush1.bf16.msra.mxu0 0
    %123 = vmatprep.subr.bf16.mxu0 0
    %124 = vmatpush1.bf16.msra.mxu0 0
    %125 = vmatprep.subr.bf16.mxu0 0
    %126 = vmatpush1.bf16.msra.mxu0 0
    %127 = vmatprep.subr.bf16.mxu0 0
    %128 = vmatpush1.bf16.msra.mxu0 0
    %129 = vmatprep.mubr.bf16.mxu0 0
    %130 = vmatmul.mubr.bf16.gmra.mrb[0].mxu0 %v95
    %v131 = vpop.f32.mrb[0].mxu0
    %v132 = vadd.f32 0.0, %v131
    %v133 = vpop.f32.mrb[0].mxu0
    %v134 = vpop.f32.mrb[0].mxu0
    %v135 = vpop.f32.mrb[0].mxu0
    %136 = vdwg.mxu0
    %v137 = vadd.f32 %v75, %v132
    %138 = vst [vmem:[#allocation2] sm:$0xff] %v137
    // Predicated region
    $region46: #{tpu_custom_call.1} parent=1 // pred_check
      %p139 = pneg %p69
    $region47: #{tpu_custom_call.1} parent=1 // pred_check_branch
      %141 = sbr.rel (%p139) target = $region49
    $region48: #{tpu_custom_call.1} parent=1 // pred_region
      %v142 = vld [vmem:[#allocation2] sm:$0xff]
      %v143 = vld [vmem:[%s2] sm:$0x1]
      %v145 = vlaneseq
      %v146 = vshrl.u32 %v145, 7
      %v147 = vsub.s32 0, %v146
      %v148 = vrot.slane %v143, %v147
      %v150 = vadd.f32 %v142, %v148
      %151 = vadd.xlane.f32.xlu0 %v150
      %v152 = vpop.xlane.xlu0 %151
      %v153 = vrcp.pop 128.0
      %v154 = vmul.f32 %v152, %v153
      %v155 = vsub.f32 %v150, %v154
      %v156 = vmul.f32 %v155, %v155
      %157 = vadd.xlane.f32.xlu0 %v156
      %v158 = vpop.xlane.xlu0 %157
      %v159 = vmul.f32 %v158, %v153
      %v160 = vadd.f32 %v159, 1e-05
      %v161 = vrsqrt.pop %v160
      %v162 = vmul.f32 %v155, %v161
      %vm163 = vcmp.ge.f32.partialorder %v162, 0.0
      %v164 = vmul.f32 %v162, 0.01
      %v165 = vsel %vm163, %v162, %v164
      %v166 = vpack.c.bf16 %v165, %v165
      %v167 = vld [vmem:[#allocation9] sm:$0xf]
      %v168 = vld [vmem:[#allocation9 + $0x4] sm:$0xf]
      %v169 = vld [vmem:[#allocation9 + $0x8] sm:$0xf]
      %v170 = vld [vmem:[#allocation9 + $0xc] sm:$0xf]
      %v171 = vld [vmem:[#allocation9 + $0x10] sm:$0xf]
      %v172 = vld [vmem:[#allocation9 + $0x14] sm:$0xf]
      %v173 = vld [vmem:[#allocation9 + $0x18] sm:$0xf]
      %v174 = vld [vmem:[#allocation9 + $0x1c] sm:$0xf]
      %v175 = vld [vmem:[#allocation9 + $0x20] sm:$0xf]
      %v176 = vld [vmem:[#allocation9 + $0x24] sm:$0xf]
      %v177 = vld [vmem:[#allocation9 + $0x28] sm:$0xf]
      %v178 = vld [vmem:[#allocation9 + $0x2c] sm:$0xf]
      %v179 = vld [vmem:[#allocation9 + $0x30] sm:$0xf]
      %v180 = vld [vmem:[#allocation9 + $0x34] sm:$0xf]
      %v181 = vld [vmem:[#allocation9 + $0x38] sm:$0xf]
      %v182 = vld [vmem:[#allocation9 + $0x3c] sm:$0xf]
      %v183 = vld [vmem:[%s4] sm:$0x1]
      %v185 = vlaneseq
      %v186 = vshrl.u32 %v185, 7
      %v187 = vsub.s32 0, %v186
      %v188 = vrot.slane %v183, %v187
      %v206 = vunpack.c.l.b16 %v167
      %v207 = vunpack.c.l.b16 %v168
      %v208 = vunpack.c.l.b16 %v169
      %v209 = vunpack.c.l.b16 %v170
      %v210 = vunpack.c.l.b16 %v171
      %v211 = vunpack.c.l.b16 %v172
      %v212 = vunpack.c.l.b16 %v173
      %v213 = vunpack.c.l.b16 %v174
      %v214 = vunpack.c.l.b16 %v175
      %v215 = vunpack.c.l.b16 %v176
      %v216 = vunpack.c.l.b16 %v177
      %v217 = vunpack.c.l.b16 %v178
      %v218 = vunpack.c.l.b16 %v179
      %v219 = vunpack.c.l.b16 %v180
      %v220 = vunpack.c.l.b16 %v181
      %v221 = vunpack.c.l.b16 %v182
      %v222 = vpack.c.b16 %v207, %v206
      %v223 = vpack.c.b16 %v209, %v208
      %v224 = vpack.c.b16 %v211, %v210
      %v225 = vpack.c.b16 %v213, %v212
      %v226 = vpack.c.b16 %v215, %v214
      %v227 = vpack.c.b16 %v217, %v216
      %v228 = vpack.c.b16 %v219, %v218
      %v229 = vpack.c.b16 %v221, %v220
      %238 = vmatprep.subr.bf16.mxu0 0
      %239 = vmatpush1.bf16.msra.mxu0 %v222
      %240 = vmatprep.subr.bf16.mxu0 0
      %241 = vmatpush1.bf16.msra.mxu0 %v223
      %242 = vmatprep.subr.bf16.mxu0 0
      %243 = vmatpush1.bf16.msra.mxu0 %v224
      %244 = vmatprep.subr.bf16.mxu0 0
      %245 = vmatpush1.bf16.msra.mxu0 %v225
      %246 = vmatprep.subr.bf16.mxu0 0
      %247 = vmatpush1.bf16.msra.mxu0 %v226
      %248 = vmatprep.subr.bf16.mxu0 0
      %249 = vmatpush1.bf16.msra.mxu0 %v227
      %250 = vmatprep.subr.bf16.mxu0 0
      %251 = vmatpush1.bf16.msra.mxu0 %v228
      %252 = vmatprep.subr.bf16.mxu0 0
      %253 = vmatpush1.bf16.msra.mxu0 %v229
      %254 = vmatprep.subr.bf16.mxu0 0
      %255 = vmatpush1.bf16.msra.mxu0 0
      %256 = vmatprep.subr.bf16.mxu0 0
      %257 = vmatpush1.bf16.msra.mxu0 0
      %258 = vmatprep.subr.bf16.mxu0 0
      %259 = vmatpush1.bf16.msra.mxu0 0
      %260 = vmatprep.subr.bf16.mxu0 0
      %261 = vmatpush1.bf16.msra.mxu0 0
      %262 = vmatprep.subr.bf16.mxu0 0
      %263 = vmatpush1.bf16.msra.mxu0 0
      %264 = vmatprep.subr.bf16.mxu0 0
      %265 = vmatpush1.bf16.msra.mxu0 0
      %266 = vmatprep.subr.bf16.mxu0 0
      %267 = vmatpush1.bf16.msra.mxu0 0
      %268 = vmatprep.subr.bf16.mxu0 0
      %269 = vmatpush1.bf16.msra.mxu0 0
      %270 = vmatprep.mubr.bf16.mxu0 0
      %271 = vmatmul.mubr.bf16.gmra.mrb[0].mxu0 %v166
      %v272 = vpop.f32.mrb[0].mxu0
      %v273 = vadd.f32 %v188, %v272
      %v274 = vpop.f32.mrb[0].mxu0
      %v275 = vpop.f32.mrb[0].mxu0
      %v276 = vpop.f32.mrb[0].mxu0
      %277 = vdwg.mxu0
      %278 = vadd.xlane.f32.xlu0 %v273
      %v279 = vpop.xlane.xlu0 %278
      %v280 = vmul.f32 %v279, %v153
      %v281 = vsub.f32 %v273, %v280
      %v282 = vmul.f32 %v281, %v281
      %283 = vadd.xlane.f32.xlu0 %v282
      %v284 = vpop.xlane.xlu0 %283
      %v285 = vmul.f32 %v284, %v153
      %v286 = vadd.f32 %v285, 1e-05
      %v287 = vrsqrt.pop %v286
      %v288 = vmul.f32 %v281, %v287
      %vm289 = vcmp.ge.f32.partialorder %v288, 0.0
      %v290 = vmul.f32 %v288, 0.01
      %v291 = vsel %vm289, %v288, %v290
      %v292 = vld [vmem:[%s5] sm:$0x1]
      %v293 = vld [vmem:[#allocation3] sm:$0x1]
      %295 = vset.pattern.permute.xlu0 0
      %296 = vperm.xlu0 %295, %v293
      %v297 = vpop.permute.xlu0 %296
      %v299 = vlaneseq
      %v300 = vshrl.u32 %v299, 7
      %v301 = vsub.s32 0, %v300
      %v302 = vrot.slane %v297, %v301
      %303 = vmatprep.subr.mxu0 0.0
      %304 = vmatpush1.xpose.msra.mxu0 %v291
      %305 = vmatprep.subr.mxu0 0.0
      %306 = vmatpush1.xpose.msra.mxu0 0.0
      %307 = vmatprep.subr.mxu0 0.0
      %308 = vmatpush1.xpose.msra.mxu0 0.0
      %309 = vmatprep.subr.mxu0 0.0
      %310 = vmatpush1.xpose.msra.mxu0 0.0
      %311 = vmatprep.subr.mxu0 0.0
      %312 = vmatpush1.xpose.msra.mxu0 0.0
      %313 = vmatprep.subr.mxu0 0.0
      %314 = vmatpush1.xpose.msra.mxu0 0.0
      %315 = vmatprep.subr.mxu0 0.0
      %316 = vmatpush1.xpose.msra.mxu0 0.0
      %317 = vmatprep.subr.mxu0 0.0
      %318 = vmatpush1.xpose.msra.mxu0 0.0
      %319 = vmatprep.subr.mxu0 0.0
      %320 = vmatpush1.xpose.msra.mxu0 0.0
      %321 = vmatprep.subr.mxu0 0.0
      %322 = vmatpush1.xpose.msra.mxu0 0.0
      %323 = vmatprep.subr.mxu0 0.0
      %324 = vmatpush1.xpose.msra.mxu0 0.0
      %325 = vmatprep.subr.mxu0 0.0
      %326 = vmatpush1.xpose.msra.mxu0 0.0
      %327 = vmatprep.subr.mxu0 0.0
      %328 = vmatpush1.xpose.msra.mxu0 0.0
      %329 = vmatprep.subr.mxu0 0.0
      %330 = vmatpush1.xpose.msra.mxu0 0.0
      %331 = vmatprep.subr.mxu0 0.0
      %332 = vmatpush1.xpose.msra.mxu0 0.0
      %333 = vmatprep.subr.mxu0 0.0
      %334 = vmatpush1.xpose.msra.mxu0 0.0
      %335 = vmatprep.subr.mxu0 0.0
      %336 = vmatpush1.xpose.msra.mxu0 0.0
      %337 = vmatprep.subr.mxu0 0.0
      %338 = vmatpush1.xpose.msra.mxu0 0.0
      %339 = vmatprep.subr.mxu0 0.0
      %340 = vmatpush1.xpose.msra.mxu0 0.0
      %341 = vmatprep.subr.mxu0 0.0
      %342 = vmatpush1.xpose.msra.mxu0 0.0
      %343 = vmatprep.subr.mxu0 0.0
      %344 = vmatpush1.xpose.msra.mxu0 0.0
      %345 = vmatprep.subr.mxu0 0.0
      %346 = vmatpush1.xpose.msra.mxu0 0.0
      %347 = vmatprep.subr.mxu0 0.0
      %348 = vmatpush1.xpose.msra.mxu0 0.0
      %349 = vmatprep.subr.mxu0 0.0
      %350 = vmatpush1.xpose.msra.mxu0 0.0
      %351 = vmatprep.subr.mxu0 0.0
      %352 = vmatpush1.xpose.msra.mxu0 0.0
      %353 = vmatprep.subr.mxu0 0.0
      %354 = vmatpush1.xpose.msra.mxu0 0.0
      %355 = vmatprep.subr.mxu0 0.0
      %356 = vmatpush1.xpose.msra.mxu0 0.0
      %357 = vmatprep.subr.mxu0 0.0
      %358 = vmatpush1.xpose.msra.mxu0 0.0
      %359 = vmatprep.subr.mxu0 0.0
      %360 = vmatpush1.xpose.msra.mxu0 0.0
      %361 = vmatprep.subr.mxu0 0.0
      %362 = vmatpush1.xpose.msra.mxu0 0.0
      %363 = vmatprep.subr.mxu0 0.0
      %364 = vmatpush1.xpose.msra.mxu0 0.0
      %365 = vmatprep.subr.mxu0 0.0
      %366 = vmatpush1.xpose.msra.mxu0 0.0
      %367 = vmatprep.mubr.f32.mxu0 0.0
      %368 = vmatmul.mubr.f32.gmra.mrb[0].mxu0 %v292
      %v369 = vpop.f32.mrb[0].mxu0
      %v370 = vadd.f32 %v302, %v369
      %v371 = vpop.f32.mrb[0].mxu0
      %372 = vdwg.mxu0
      %vm373 = vcmp.ge.f32.partialorder %v370, 0.0
      %v374 = vmul.f32 %v370, 0.01
      %v375 = vsel %vm373, %v370, %v374
      %vm376 = vcmask 57344
      %377 = vst.msk [vmem:[#allocation10] sm:$0x1] %vm376, %v375
    $region49: #{tpu_custom_call.1} parent=1 // pred_fallthru
      _
    // Predicated region
    $region50: #{tpu_custom_call.1} parent=1 // pred_check
      _
    $region51: #{tpu_custom_call.1} parent=1 // pred_check_branch
      %379 = sbr.rel (0) target = $region53
    $region52: #{tpu_custom_call.1} parent=1 // pred_region
      %s381 = ssub.s32 16, 16
      %382 = vsyncadd [#allocation6], %s381
      %s384 = sshll.u32 [#allocation10], 4
      %s385 = int_to_ptr.vmem [resolvable:$true] %s384
      %387 = dma.vmem_to_hbm [thread:$0]  %s385, 16, %s7, [#allocation6]
    $region53: #{tpu_custom_call.1} parent=1 // pred_fallthru
      _
    // Predicated region
    $region54: #{tpu_custom_call.1} parent=1 // pred_check
      _
    $region55: #{tpu_custom_call.1} parent=1 // pred_check_branch
      %389 = sbr.rel (0) target = $region57
    $region56: #{tpu_custom_call.1} parent=1 // pred_region
      %390 = dma.done [#allocation6], 16
    $region57: #{tpu_custom_call.1} parent=1 // pred_fallthru
      _
    %391 = vsyncpa [#allocation5], 1
    %392 = vsyncpa [#allocation8], 1
    %393 = vsyncpa [#allocation6], 1

// kernel: tpu_custom_call.1
$region0: #{tpu_custom_call.1}
  #allocation0 [shape = 'u32[]', space=smem, size = 0x4, offset = 0x4, fixed_abs, tag = 'smem constant byte address 0x4 - core index']
  #allocation1 [shape = 'u32[144,128]{1,0:T(1,128)}', space=vmem, size = 0x12000, scoped, tag = 'internal scratch']
  #allocation2 [shape = 'f32[8,128]{1,0:T(8,128)}', space=vmem, size = 0x1000, scoped, tag = 'scratch operand']
  #allocation3 [shape = 'f32[1,1]{1,0:T(1,128)S(1)}', space=vmem, size = 0x200, scoped, tag = 'scoped memory for tpu_custom_call.1']
  %s0 = inlined_call_operand.hbm [shape: f32[8,32], index: 0, kind: input, shape index: {}]
  %s1 = inlined_call_operand.hbm [shape: bf16[32,128], index: 1, kind: input, shape index: {}]
  %s2 = inlined_call_operand.vmem [shape: f32[1,128], index: 2, kind: input, shape index: {}]
  %s3 = inlined_call_operand.hbm [shape: bf16[128,128], index: 3, kind: input, shape index: {}]
  %s4 = inlined_call_operand.vmem [shape: f32[1,128], index: 4, kind: input, shape index: {}]
  %s5 = inlined_call_operand.vmem [shape: f32[1,128], index: 5, kind: input, shape index: {}]
  %s6 = inlined_call_operand.<no memory space> [shape: f32[1,1], index: 6, kind: input, shape index: {}]
  %s7 = inlined_call_operand.hbm [shape: f32[1,1,8], index: 7, kind: output, shape index: {}]
  %s8 = sld [smem:[#allocation0]]
  $region58: #{tpu_custom_call.1} parent=0
    _
  %s10 = ssub.s32 1, %s8
  %s11 = scalar_select 0, %s10, %s8
  %v12 = vstv %s6
  %13 = vst [vmem:[#allocation3] sm:$0x1] %v12
  $region1: #{tpu_custom_call.1} parent=0
    #allocation4 [shape = 'u8[4096]{0}', space=vmem, size = 0x1000, scoped, tag = 'input window, operand 0, single buffered']
    #allocation5 [shape = 's32[1]{0}', space=sflag, size = 0x4, scoped, tag = 'scoped memory for tpu_custom_call.1']
    #allocation6 [shape = 's32[1]{0}', space=sflag, size = 0x4, scoped, tag = 'scoped memory for tpu_custom_call.1']
    #allocation7 [shape = 'u8[8192]{0}', space=vmem, size = 0x2000, scoped, tag = 'input window, operand 1, single buffered']
    #allocation8 [shape = 's32[1]{0}', space=sflag, size = 0x4, scoped, tag = 'scoped memory for tpu_custom_call.1']
    #allocation9 [shape = 'u8[32768]{0}', space=vmem, size = 0x8000, scoped, tag = 'input window, operand 3, single buffered']
    #allocation10 [shape = 'u8[512]{0}', space=vmem, size = 0x400, scoped, tag = 'output window, operand 0, single buffered']
    %14 = vsyncpa [#allocation5], 0
    %15 = vsyncpa [#allocation8], 0
    %16 = vsyncpa [#allocation6], 0
    // Predicated region
    $region2: #{tpu_custom_call.1} parent=1 // pred_check
      _
    $region3: #{tpu_custom_call.1} parent=1 // pred_check_branch
      %18 = sbr.rel (0) target = $region5
    $region4: #{tpu_custom_call.1} parent=1 // pred_region
      %s20 = ssub.s32 128, 128
      %21 = vsyncadd [#allocation5], %s20
      %s23 = sshll.u32 [#allocation4], 4
      %s24 = int_to_ptr.vmem [resolvable:$true] %s23
      %26 = dma.hbm_to_vmem [thread:$0]  %s0, 128, %s24, [#allocation5]
    $region5: #{tpu_custom_call.1} parent=1 // pred_fallthru
      _
    // Predicated region
    $region6: #{tpu_custom_call.1} parent=1 // pred_check
      _
    $region7: #{tpu_custom_call.1} parent=1 // pred_check_branch
      %28 = sbr.rel (0) target = $region9
    $region8: #{tpu_custom_call.1} parent=1 // pred_region
      %s30 = ssub.s32 256, 256
      %31 = vsyncadd [#allocation8], %s30
      %s32 = sshll.u32 [#allocation7], 4
      %s33 = int_to_ptr.vmem [resolvable:$true] %s32
      %38 = dma.hbm_to_vmem [thread:$0]  %s1, 256, %s33, [#allocation8], 64, 64, 4
    $region9: #{tpu_custom_call.1} parent=1 // pred_fallthru
      _
    // Predicated region
    $region10: #{tpu_custom_call.1} parent=1 // pred_check
      _
    $region11: #{tpu_custom_call.1} parent=1 // pred_check_branch
      %40 = sbr.rel (0) target = $region13
    $region12: #{tpu_custom_call.1} parent=1 // pred_region
      _
    $region13: #{tpu_custom_call.1} parent=1 // pred_fallthru
      _
    // Predicated region
    $region14: #{tpu_custom_call.1} parent=1 // pred_check
      _
    $region15: #{tpu_custom_call.1} parent=1 // pred_check_branch
      %42 = sbr.rel (0) target = $region17
    $region16: #{tpu_custom_call.1} parent=1 // pred_region
      %s44 = ssub.s32 1024, 1024
      %45 = vsyncadd [#allocation8], %s44
      %s46 = sshll.u32 [#allocation9], 4
      %s47 = int_to_ptr.vmem [resolvable:$true] %s46
      %52 = dma.hbm_to_vmem [thread:$0]  %s3, 1024, %s47, [#allocation8], 64, 64, 4
    $region17: #{tpu_custom_call.1} parent=1 // pred_fallthru
      _
    // Predicated region
    $region18: #{tpu_custom_call.1} parent=1 // pred_check
      _
    $region19: #{tpu_custom_call.1} parent=1 // pred_check_branch
      %54 = sbr.rel (0) target = $region21
    $region20: #{tpu_custom_call.1} parent=1 // pred_region
      _
    $region21: #{tpu_custom_call.1} parent=1 // pred_fallthru
      _
    // Predicated region
    $region22: #{tpu_custom_call.1} parent=1 // pred_check
      _
    $region23: #{tpu_custom_call.1} parent=1 // pred_check_branch
      %56 = sbr.rel (0) target = $region25
    $region24: #{tpu_custom_call.1} parent=1 // pred_region
      _
    $region25: #{tpu_custom_call.1} parent=1 // pred_fallthru
      _
    // Predicated region
    $region26: #{tpu_custom_call.1} parent=1 // pred_check
      _
    $region27: #{tpu_custom_call.1} parent=1 // pred_check_branch
      %58 = sbr.rel (0) target = $region29
    $region28: #{tpu_custom_call.1} parent=1 // pred_region
      _
    $region29: #{tpu_custom_call.1} parent=1 // pred_fallthru
      _
    // Predicated region
    $region30: #{tpu_custom_call.1} parent=1 // pred_check
      _
    $region31: #{tpu_custom_call.1} parent=1 // pred_check_branch
      %60 = sbr.rel (0) target = $region33
    $region32: #{tpu_custom_call.1} parent=1 // pred_region
      %61 = dma.done [#allocation5], 128
    $region33: #{tpu_custom_call.1} parent=1 // pred_fallthru
      _
    // Predicated region
    $region34: #{tpu_custom_call.1} parent=1 // pred_check
      _
    $region35: #{tpu_custom_call.1} parent=1 // pred_check_branch
      %63 = sbr.rel (0) target = $region37
    $region36: #{tpu_custom_call.1} parent=1 // pred_region
      %64 = dma.done [#allocation8], 256
    $region37: #{tpu_custom_call.1} parent=1 // pred_fallthru
      _
    // Predicated region
    $region38: #{tpu_custom_call.1} parent=1 // pred_check
      _
    $region39: #{tpu_custom_call.1} parent=1 // pred_check_branch
      %66 = sbr.rel (0) target = $region41
    $region40: #{tpu_custom_call.1} parent=1 // pred_region
      %67 = dma.done [#allocation8], 1024
    $region41: #{tpu_custom_call.1} parent=1 // pred_fallthru
      _
    %p69 = scmp.eq.s32.totalorder 0, 0
    // Predicated region
    $region42: #{tpu_custom_call.1} parent=1 // pred_check
      %p70 = pneg %p69
    $region43: #{tpu_custom_call.1} parent=1 // pred_check_branch
      %72 = sbr.rel (%p70) target = $region45
    $region44: #{tpu_custom_call.1} parent=1 // pred_region
      %73 = vst [vmem:[#allocation2] sm:$0xff] 0.0
    $region45: #{tpu_custom_call.1} parent=1 // pred_fallthru
      _
    %v74 = vld [vmem:[#allocation4] sm:$0xff]
    %v75 = vld [vmem:[#allocation2] sm:$0xff]
    %v76 = vpack.c.bf16 %v74, %v74
    %v77 = vld [vmem:[#allocation7] sm:$0xf]
    %v78 = vld [vmem:[#allocation7 + $0x4] sm:$0xf]
    %v79 = vld [vmem:[#allocation7 + $0x8] sm:$0xf]
    %v80 = vld [vmem:[#allocation7 + $0xc] sm:$0xf]
    %v85 = vunpack.c.l.b16 %v77
    %v86 = vunpack.c.l.b16 %v78
    %v87 = vunpack.c.l.b16 %v79
    %v88 = vunpack.c.l.b16 %v80
    %v89 = vpack.c.b16 %v86, %v85
    %v90 = vpack.c.b16 %v88, %v87
    %vm93 = vcmask 261120
    %v95 = vsel %vm93, %v76, 0
    %97 = vmatprep.subr.bf16.mxu0 0
    %98 = vmatpush1.bf16.msra.mxu0 %v89
    %99 = vmatprep.subr.bf16.mxu0 0
    %100 = vmatpush1.bf16.msra.mxu0 %v90
    %101 = vmatprep.subr.bf16.mxu0 0
    %102 = vmatpush1.bf16.msra.mxu0 0
    %103 = vmatprep.subr.bf16.mxu0 0
    %104 = vmatpush1.bf16.msra.mxu0 0
    %105 = vmatprep.subr.bf16.mxu0 0
    %106 = vmatpush1.bf16.msra.mxu0 0
    %107 = vmatprep.subr.bf16.mxu0 0
    %108 = vmatpush1.bf16.msra.mxu0 0
    %109 = vmatprep.subr.bf16.mxu0 0
    %110 = vmatpush1.bf16.msra.mxu0 0
    %111 = vmatprep.subr.bf16.mxu0 0
    %112 = vmatpush1.bf16.msra.mxu0 0
    %113 = vmatprep.subr.bf16.mxu0 0
    %114 = vmatpush1.bf16.msra.mxu0 0
    %115 = vmatprep.subr.bf16.mxu0 0
    %116 = vmatpush1.bf16.msra.mxu0 0
    %117 = vmatprep.subr.bf16.mxu0 0
    %118 = vmatpush1.bf16.msra.mxu0 0
    %119 = vmatprep.subr.bf16.mxu0 0
    %120 = vmatpush1.bf16.msra.mxu0 0
    %121 = vmatprep.subr.bf16.mxu0 0
    %122 = vmatpush1.bf16.msra.mxu0 0
    %123 = vmatprep.subr.bf16.mxu0 0
    %124 = vmatpush1.bf16.msra.mxu0 0
    %125 = vmatprep.subr.bf16.mxu0 0
    %126 = vmatpush1.bf16.msra.mxu0 0
    %127 = vmatprep.subr.bf16.mxu0 0
    %128 = vmatpush1.bf16.msra.mxu0 0
    %129 = vmatprep.mubr.bf16.mxu0 0
    %130 = vmatmul.mubr.bf16.gmra.mrb[0].mxu0 %v95
    %v131 = vpop.f32.mrb[0].mxu0
    %v132 = vadd.f32 0.0, %v131
    %v133 = vpop.f32.mrb[0].mxu0
    %v134 = vpop.f32.mrb[0].mxu0
    %v135 = vpop.f32.mrb[0].mxu0
    %136 = vdwg.mxu0
    %v137 = vadd.f32 %v75, %v132
    %138 = vst [vmem:[#allocation2] sm:$0xff] %v137
    // Predicated region
    $region46: #{tpu_custom_call.1} parent=1 // pred_check
      %p139 = pneg %p69
    $region47: #{tpu_custom_call.1} parent=1 // pred_check_branch
      %141 = sbr.rel (%p139) target = $region49
    $region48: #{tpu_custom_call.1} parent=1 // pred_region
      %v142 = vld [vmem:[#allocation2] sm:$0xff]
      %v143 = vld [vmem:[%s2] sm:$0x1]
      %v145 = vlaneseq
      %v146 = vshrl.u32 %v145, 7
      %v147 = vsub.s32 0, %v146
      %v148 = vrot.slane %v143, %v147
      %v150 = vadd.f32 %v142, %v148
      %151 = vadd.xlane.f32.xlu0 %v150
      %v152 = vpop.xlane.xlu0 %151
      %v153 = vrcp.pop 128.0
      %v154 = vmul.f32 %v152, %v153
      %v155 = vsub.f32 %v150, %v154
      %v156 = vmul.f32 %v155, %v155
      %157 = vadd.xlane.f32.xlu0 %v156
      %v158 = vpop.xlane.xlu0 %157
      %v159 = vmul.f32 %v158, %v153
      %v160 = vadd.f32 %v159, 1e-05
      %v161 = vrsqrt.pop %v160
      %v162 = vmul.f32 %v155, %v161
      %vm163 = vcmp.ge.f32.partialorder %v162, 0.0
      %v164 = vmul.f32 %v162, 0.01
      %v165 = vsel %vm163, %v162, %v164
      %v166 = vpack.c.bf16 %v165, %v165
      %v167 = vld [vmem:[#allocation9] sm:$0xf]
      %v168 = vld [vmem:[#allocation9 + $0x4] sm:$0xf]
      %v169 = vld [vmem:[#allocation9 + $0x8] sm:$0xf]
      %v170 = vld [vmem:[#allocation9 + $0xc] sm:$0xf]
      %v171 = vld [vmem:[#allocation9 + $0x10] sm:$0xf]
      %v172 = vld [vmem:[#allocation9 + $0x14] sm:$0xf]
      %v173 = vld [vmem:[#allocation9 + $0x18] sm:$0xf]
      %v174 = vld [vmem:[#allocation9 + $0x1c] sm:$0xf]
      %v175 = vld [vmem:[#allocation9 + $0x20] sm:$0xf]
      %v176 = vld [vmem:[#allocation9 + $0x24] sm:$0xf]
      %v177 = vld [vmem:[#allocation9 + $0x28] sm:$0xf]
      %v178 = vld [vmem:[#allocation9 + $0x2c] sm:$0xf]
      %v179 = vld [vmem:[#allocation9 + $0x30] sm:$0xf]
      %v180 = vld [vmem:[#allocation9 + $0x34] sm:$0xf]
      %v181 = vld [vmem:[#allocation9 + $0x38] sm:$0xf]
      %v182 = vld [vmem:[#allocation9 + $0x3c] sm:$0xf]
      %v183 = vld [vmem:[%s4] sm:$0x1]
      %v185 = vlaneseq
      %v186 = vshrl.u32 %v185, 7
      %v187 = vsub.s32 0, %v186
      %v188 = vrot.slane %v183, %v187
      %v206 = vunpack.c.l.b16 %v167
      %v207 = vunpack.c.l.b16 %v168
      %v208 = vunpack.c.l.b16 %v169
      %v209 = vunpack.c.l.b16 %v170
      %v210 = vunpack.c.l.b16 %v171
      %v211 = vunpack.c.l.b16 %v172
      %v212 = vunpack.c.l.b16 %v173
      %v213 = vunpack.c.l.b16 %v174
      %v214 = vunpack.c.l.b16 %v175
      %v215 = vunpack.c.l.b16 %v176
      %v216 = vunpack.c.l.b16 %v177
      %v217 = vunpack.c.l.b16 %v178
      %v218 = vunpack.c.l.b16 %v179
      %v219 = vunpack.c.l.b16 %v180
      %v220 = vunpack.c.l.b16 %v181
      %v221 = vunpack.c.l.b16 %v182
      %v222 = vpack.c.b16 %v207, %v206
      %v223 = vpack.c.b16 %v209, %v208
      %v224 = vpack.c.b16 %v211, %v210
      %v225 = vpack.c.b16 %v213, %v212
      %v226 = vpack.c.b16 %v215, %v214
      %v227 = vpack.c.b16 %v217, %v216
      %v228 = vpack.c.b16 %v219, %v218
      %v229 = vpack.c.b16 %v221, %v220
      %238 = vmatprep.subr.bf16.mxu0 0
      %239 = vmatpush1.bf16.msra.mxu0 %v222
      %240 = vmatprep.subr.bf16.mxu0 0
      %241 = vmatpush1.bf16.msra.mxu0 %v223
      %242 = vmatprep.subr.bf16.mxu0 0
      %243 = vmatpush1.bf16.msra.mxu0 %v224
      %244 = vmatprep.subr.bf16.mxu0 0
      %245 = vmatpush1.bf16.msra.mxu0 %v225
      %246 = vmatprep.subr.bf16.mxu0 0
      %247 = vmatpush1.bf16.msra.mxu0 %v226
      %248 = vmatprep.subr.bf16.mxu0 0
      %249 = vmatpush1.bf16.msra.mxu0 %v227
      %250 = vmatprep.subr.bf16.mxu0 0
      %251 = vmatpush1.bf16.msra.mxu0 %v228
      %252 = vmatprep.subr.bf16.mxu0 0
      %253 = vmatpush1.bf16.msra.mxu0 %v229
      %254 = vmatprep.subr.bf16.mxu0 0
      %255 = vmatpush1.bf16.msra.mxu0 0
      %256 = vmatprep.subr.bf16.mxu0 0
      %257 = vmatpush1.bf16.msra.mxu0 0
      %258 = vmatprep.subr.bf16.mxu0 0
      %259 = vmatpush1.bf16.msra.mxu0 0
      %260 = vmatprep.subr.bf16.mxu0 0
      %261 = vmatpush1.bf16.msra.mxu0 0
      %262 = vmatprep.subr.bf16.mxu0 0
      %263 = vmatpush1.bf16.msra.mxu0 0
      %264 = vmatprep.subr.bf16.mxu0 0
      %265 = vmatpush1.bf16.msra.mxu0 0
      %266 = vmatprep.subr.bf16.mxu0 0
      %267 = vmatpush1.bf16.msra.mxu0 0
      %268 = vmatprep.subr.bf16.mxu0 0
      %269 = vmatpush1.bf16.msra.mxu0 0
      %270 = vmatprep.mubr.bf16.mxu0 0
      %271 = vmatmul.mubr.bf16.gmra.mrb[0].mxu0 %v166
      %v272 = vpop.f32.mrb[0].mxu0
      %v273 = vadd.f32 %v188, %v272
      %v274 = vpop.f32.mrb[0].mxu0
      %v275 = vpop.f32.mrb[0].mxu0
      %v276 = vpop.f32.mrb[0].mxu0
      %277 = vdwg.mxu0
      %278 = vadd.xlane.f32.xlu0 %v273
      %v279 = vpop.xlane.xlu0 %278
      %v280 = vmul.f32 %v279, %v153
      %v281 = vsub.f32 %v273, %v280
      %v282 = vmul.f32 %v281, %v281
      %283 = vadd.xlane.f32.xlu0 %v282
      %v284 = vpop.xlane.xlu0 %283
      %v285 = vmul.f32 %v284, %v153
      %v286 = vadd.f32 %v285, 1e-05
      %v287 = vrsqrt.pop %v286
      %v288 = vmul.f32 %v281, %v287
      %vm289 = vcmp.ge.f32.partialorder %v288, 0.0
      %v290 = vmul.f32 %v288, 0.01
      %v291 = vsel %vm289, %v288, %v290
      %v292 = vld [vmem:[%s5] sm:$0x1]
      %v293 = vld [vmem:[#allocation3] sm:$0x1]
      %295 = vset.pattern.permute.xlu0 0
      %296 = vperm.xlu0 %295, %v293
      %v297 = vpop.permute.xlu0 %296
      %v299 = vlaneseq
      %v300 = vshrl.u32 %v299, 7
      %v301 = vsub.s32 0, %v300
      %v302 = vrot.slane %v297, %v301
      %303 = vmatprep.subr.mxu0 0.0
      %304 = vmatpush1.xpose.msra.mxu0 %v291
      %305 = vmatprep.subr.mxu0 0.0
      %306 = vmatpush1.xpose.msra.mxu0 0.0
      %307 = vmatprep.subr.mxu0 0.0
      %308 = vmatpush1.xpose.msra.mxu0 0.0
      %309 = vmatprep.subr.mxu0 0.0
      %310 = vmatpush1.xpose.msra.mxu0 0.0
      %311 = vmatprep.subr.mxu0 0.0
      %312 = vmatpush1.xpose.msra.mxu0 0.0
      %313 = vmatprep.subr.mxu0 0.0
      %314 = vmatpush1.xpose.msra.mxu0 0.0
      %315 = vmatprep.subr.mxu0 0.0
      %316 = vmatpush1.xpose.msra.mxu0 0.0
      %317 = vmatprep.subr.mxu0 0.0
      %318 = vmatpush1.xpose.msra.mxu0 0.0
      %319 = vmatprep.subr.mxu0 0.0
      %320 = vmatpush1.xpose.msra.mxu0 0.0
      %321 = vmatprep.subr.mxu0 0.0
      %322 = vmatpush1.xpose.msra.mxu0 0.0
      %323 = vmatprep.subr.mxu0 0.0
      %324 = vmatpush1.xpose.msra.mxu0 0.0
      %325 = vmatprep.subr.mxu0 0.0
      %326 = vmatpush1.xpose.msra.mxu0 0.0
      %327 = vmatprep.subr.mxu0 0.0
      %328 = vmatpush1.xpose.msra.mxu0 0.0
      %329 = vmatprep.subr.mxu0 0.0
      %330 = vmatpush1.xpose.msra.mxu0 0.0
      %331 = vmatprep.subr.mxu0 0.0
      %332 = vmatpush1.xpose.msra.mxu0 0.0
      %333 = vmatprep.subr.mxu0 0.0
      %334 = vmatpush1.xpose.msra.mxu0 0.0
      %335 = vmatprep.subr.mxu0 0.0
      %336 = vmatpush1.xpose.msra.mxu0 0.0
      %337 = vmatprep.subr.mxu0 0.0
      %338 = vmatpush1.xpose.msra.mxu0 0.0
      %339 = vmatprep.subr.mxu0 0.0
      %340 = vmatpush1.xpose.msra.mxu0 0.0
      %341 = vmatprep.subr.mxu0 0.0
      %342 = vmatpush1.xpose.msra.mxu0 0.0
      %343 = vmatprep.subr.mxu0 0.0
      %344 = vmatpush1.xpose.msra.mxu0 0.0
      %345 = vmatprep.subr.mxu0 0.0
      %346 = vmatpush1.xpose.msra.mxu0 0.0
      %347 = vmatprep.subr.mxu0 0.0
      %348 = vmatpush1.xpose.msra.mxu0 0.0
      %349 = vmatprep.subr.mxu0 0.0
      %350 = vmatpush1.xpose.msra.mxu0 0.0
      %351 = vmatprep.subr.mxu0 0.0
      %352 = vmatpush1.xpose.msra.mxu0 0.0
      %353 = vmatprep.subr.mxu0 0.0
      %354 = vmatpush1.xpose.msra.mxu0 0.0
      %355 = vmatprep.subr.mxu0 0.0
      %356 = vmatpush1.xpose.msra.mxu0 0.0
      %357 = vmatprep.subr.mxu0 0.0
      %358 = vmatpush1.xpose.msra.mxu0 0.0
      %359 = vmatprep.subr.mxu0 0.0
      %360 = vmatpush1.xpose.msra.mxu0 0.0
      %361 = vmatprep.subr.mxu0 0.0
      %362 = vmatpush1.xpose.msra.mxu0 0.0
      %363 = vmatprep.subr.mxu0 0.0
      %364 = vmatpush1.xpose.msra.mxu0 0.0
      %365 = vmatprep.subr.mxu0 0.0
      %366 = vmatpush1.xpose.msra.mxu0 0.0
      %367 = vmatprep.mubr.f32.mxu0 0.0
      %368 = vmatmul.mubr.f32.gmra.mrb[0].mxu0 %v292
      %v369 = vpop.f32.mrb[0].mxu0
      %v370 = vadd.f32 %v302, %v369
      %v371 = vpop.f32.mrb[0].mxu0
      %372 = vdwg.mxu0
      %vm373 = vcmp.ge.f32.partialorder %v370, 0.0
      %v374 = vmul.f32 %v370, 0.01
      %v375 = vsel %vm373, %v370, %v374
      %vm376 = vcmask 57344
      %377 = vst.msk [vmem:[#allocation10] sm:$0x1] %vm376, %v375
    $region49: #{tpu_custom_call.1} parent=1 // pred_fallthru
      _
    // Predicated region
    $region50: #{tpu_custom_call.1} parent=1 // pred_check
      _
    $region51: #{tpu_custom_call.1} parent=1 // pred_check_branch
      %379 = sbr.rel (0) target = $region53
    $region52: #{tpu_custom_call.1} parent=1 // pred_region
      %s381 = ssub.s32 16, 16
      %382 = vsyncadd [#allocation6], %s381
      %s384 = sshll.u32 [#allocation10], 4
      %s385 = int_to_ptr.vmem [resolvable:$true] %s384
      %387 = dma.vmem_to_hbm [thread:$0]  %s385, 16, %s7, [#allocation6]
    $region53: #{tpu_custom_call.1} parent=1 // pred_fallthru
      _
    // Predicated region
    $region54: #{tpu_custom_call.1} parent=1 // pred_check
      _
    $region55: #{tpu_custom_call.1} parent=1 // pred_check_branch
      %389 = sbr.rel (0) target = $region57
    $region56: #{tpu_custom_call.1} parent=1 // pred_region
      %390 = dma.done [#allocation6], 16
    $region57: #{tpu_custom_call.1} parent=1 // pred_fallthru
      _
    %391 = vsyncpa [#allocation5], 1
    %392 = vsyncpa [#allocation8], 1
    %393 = vsyncpa [#allocation6], 1

</llo_original>
